<compile_context>
chip_gen: v6e
topology: v6e:2x2x1
jax: 0.10.0
libtpu: 0.0.40
codegen_flags: <defaults>
</compile_context>

<pallas_src>
import jax
import jax.numpy as jnp
from jax.experimental import pallas as pl

N, CIN, H, W = 2, 4, 16, 16
HW = H * W                      # 256 (multiple of 128 -> clean lane slices)
CMID = 8
IN_FEATURES = 32
NUM_MAKES = 8
NUM_TYPES = 8
NUM_CLASSES = 16
OUT_WIDTH = NUM_CLASSES + NUM_MAKES + NUM_TYPES   # 32

SLAB_LANES = 128
SLAB_ROWS = 144                 # 8+8+32+32+16+16+16+16, all bands 8-row aligned

_FLOPS = (2 * CMID * (9 * CIN) * (N * HW)                   # conv im2col matmul
          + CMID * N * HW                                    # pooling reduction
          + 2 * IN_FEATURES * CMID * N                       # base linear
          + 2 * (NUM_MAKES + NUM_TYPES) * IN_FEATURES * N    # brand|type heads
          + 2 * NUM_CLASSES * (IN_FEATURES + NUM_MAKES + NUM_TYPES) * N)  # class head
_BYTES = 4 * (9 * CIN * N * HW + SLAB_ROWS * SLAB_LANES + OUT_WIDTH * N)


# ------------------------- One-time weight packing ---------------------------
def pack_params(params):
    """Pack all (transposed) weights/biases into one lane-dense (144,128) slab.

    Row bands (all offsets/extents multiples of 8, lane offset always 0):
      [  0: 16) conv :  wconv^T (8,36)  | conv_b^T (8,1)
      [ 16: 80) base :  wbase^T (32,8)  | bbase^T (32,1)
      [ 80:112) b|t  :  wbt^T  (16,32)  | bbt^T  (16,1)
      [112:144) class:  wc^T   (16,48)  | bc^T   (16,1)
    """
    wbt = jnp.concatenate([params["wb"], params["wt"]], axis=1)   # (32, 16)
    bbt = jnp.concatenate([params["bb"], params["bt"]], axis=1)   # (1, 16)
    slab = jnp.zeros((SLAB_ROWS, SLAB_LANES), jnp.float32)
    slab = slab.at[0:8, 0:36].set(params["conv_w"].reshape(9 * CIN, CMID).T)
    slab = slab.at[8:16, 0:1].set(params["conv_b"].T)
    slab = slab.at[16:48, 0:CMID].set(params["wbase"].T)
    slab = slab.at[48:80, 0:1].set(params["bbase"].T)
    slab = slab.at[80:96, 0:IN_FEATURES].set(wbt.T)
    slab = slab.at[96:112, 0:1].set(bbt.T)
    slab = slab.at[112:128, 0:48].set(params["wc"].T)
    slab = slab.at[128:144, 0:1].set(params["bc"].T)
    return slab


# ------------------------- Fused kernel --------------------------------------
def fused_kernel(patches_t_ref, slab_ref, out_ref):
    # Static, 8-row-aligned carves of the single weight slab (lane offset 0).
    wconv_t = slab_ref[0:8, 0:36]            # (CMID, 9*CIN)
    convb_t = slab_ref[8:16, 0:1]            # (CMID, 1)
    wbase_t = slab_ref[16:48, 0:CMID]        # (IN_FEATURES, CMID)
    bbase_t = slab_ref[48:80, 0:1]           # (IN_FEATURES, 1)
    wbt_t = slab_ref[80:96, 0:IN_FEATURES]   # (16, IN_FEATURES)
    bbt_t = slab_ref[96:112, 0:1]            # (16, 1)
    wc_t = slab_ref[112:128, 0:48]           # (NUM_CLASSES, 48)
    bc_t = slab_ref[128:144, 0:1]            # (NUM_CLASSES, 1)

    # im2col conv + bias + ReLU in lane-major layout: (CMID, N*H*W) = (8, 512).
    conv_t = jnp.dot(wconv_t, patches_t_ref[...],
                     preferred_element_type=jnp.float32) + convb_t
    conv_t = jnp.maximum(conv_t, 0.0)

    # Global average pooling: per-image 128-aligned lane-slice reductions (XLU).
    cols = [jnp.sum(conv_t[:, i * HW:(i + 1) * HW], axis=1, keepdims=True)
            for i in range(N)]
    pooled_t = jnp.concatenate(cols, axis=1) * jnp.float32(1.0 / HW)   # (CMID, N)

    # Base tail: Linear(CMID -> IN_FEATURES) + ReLU; classifier[6] = identity.
    feat_t = jnp.maximum(
        jnp.dot(wbase_t, pooled_t, preferred_element_type=jnp.float32) + bbase_t,
        0.0)                                                           # (32, N)

    # brand_fc | type_fc fused into one matmul (Dropout identity in eval).
    bt_t = jnp.dot(wbt_t, feat_t,
                   preferred_element_type=jnp.float32) + bbt_t         # (16, N)

    # class_fc: ReLU(concat([feat, brand, typ])) @ wc + bc, transposed layout.
    concat_relu_t = jnp.concatenate(
        [jnp.maximum(feat_t, 0.0), jnp.maximum(bt_t, 0.0)], axis=0)    # (48, N)
    cls_t = jnp.dot(wc_t, concat_relu_t,
                    preferred_element_type=jnp.float32) + bc_t         # (16, N)

    # Single packed output: rows [0:16)=cls, [16:24)=brand, [24:32)=typ.
    out_ref[...] = jnp.concatenate([cls_t, bt_t], axis=0)              # (32, N)


# ------------------------- Wrapper (jit'ed; per-call path only) --------------
@jax.jit
def mtlc_stanford_forward(x_nchw, slab):
    x = jnp.transpose(x_nchw, (0, 2, 3, 1)).astype(jnp.float32)  # NCHW -> NHWC
    n, h, w, cin = x.shape

    # im2col, built directly in transposed (9*CIN, N*H*W) layout (fused by XLA).
    xp = jnp.pad(x, ((0, 0), (1, 1), (1, 1), (0, 0)))
    slices = [xp[:, dh:dh + h, dw:dw + w, :]
              for dh in range(3) for dw in range(3)]             # each (N,H,W,C)
    patches_t = jnp.stack(slices, axis=0).transpose(0, 4, 1, 2, 3).reshape(
        9 * cin, n * h * w)                                      # (36, 512)

    # No grid: nothing to pipeline at this size; whole arrays live in VMEM.
    # TODO(synk): if the injected backbone is scaled to realistic H/W/C, tile the
    # N*H*W lane dim with a grid (megacore 'parallel' axis) instead of one block.
    out_t = pl.pallas_call(
        fused_kernel,
        out_shape=jax.ShapeDtypeStruct((OUT_WIDTH, n), jnp.float32),
        cost_estimate=pl.CostEstimate(flops=_FLOPS, transcendentals=0,
                                      bytes_accessed=_BYTES),
    )(patches_t, slab)

    out = out_t.T                                                # (N, 32)
    cls = out[:, :NUM_CLASSES]
    brand = out[:, NUM_CLASSES:NUM_CLASSES + NUM_MAKES]
    typ = out[:, NUM_CLASSES + NUM_MAKES:]
    return cls, brand, typ


# ------------------------- Pure-JAX reference (self-check) -------------------
def reference_forward(x_nchw, params):
    x = jnp.transpose(x_nchw, (0, 2, 3, 1)).astype(jnp.float32)
    out = jax.lax.conv_general_dilated(
        x, params["conv_w"], (1, 1), "SAME",
        dimension_numbers=("NHWC", "HWIO", "NHWC"))
    out = jnp.maximum(out + params["conv_b"], 0.0)
    pooled = jnp.mean(out, axis=(1, 2))
    feat = jnp.maximum(pooled @ params["wbase"] + params["bbase"], 0.0)
    brand = feat @ params["wb"] + params["bb"]
    typ = feat @ params["wt"] + params["bt"]
    concat = jnp.concatenate([feat, brand, typ], axis=1)
    cls = jnp.maximum(concat, 0.0) @ params["wc"] + params["bc"]
    return cls, brand, typ


def init_params(key):
    ks = jax.random.split(key, 10)
    s = 0.1
    return {
        "conv_w": s * jax.random.normal(ks[0], (3, 3, CIN, CMID), jnp.float32),
        "conv_b": s * jax.random.normal(ks[1], (1, CMID), jnp.float32),
        "wbase": s * jax.random.normal(ks[2], (CMID, IN_FEATURES), jnp.float32),
        "bbase": s * jax.random.normal(ks[3], (1, IN_FEATURES), jnp.float32),
        "wb": s * jax.random.normal(ks[4], (IN_FEATURES, NUM_MAKES), jnp.float32),
        "bb": s * jax.random.normal(ks[5], (1, NUM_MAKES), jnp.float32),
        "wt": s * jax.random.normal(ks[6], (IN_FEATURES, NUM_TYPES), jnp.float32),
        "bt": s * jax.random.normal(ks[7], (1, NUM_TYPES), jnp.float32),
        "wc": s * jax.random.normal(
            ks[8], (IN_FEATURES + NUM_MAKES + NUM_TYPES, NUM_CLASSES), jnp.float32),
        "bc": s * jax.random.normal(ks[9], (1, NUM_CLASSES), jnp.float32),
    }


if __name__ == "__main__":
    key = jax.random.PRNGKey(0)
    kx, kp = jax.random.split(key)
    x = jax.random.normal(kx, (N, CIN, H, W), jnp.float32)   # PyTorch-style NCHW
    params = init_params(kp)

    # Call-invariant prep hoisted out of the per-call path.
    slab = jax.block_until_ready(pack_params(params))

    cls, brand, typ = jax.block_until_ready(mtlc_stanford_forward(x, slab))
    rcls, rbrand, rtyp = jax.block_until_ready(reference_forward(x, params))

    assert cls.shape == (N, NUM_CLASSES)
    assert brand.shape == (N, NUM_MAKES)
    assert typ.shape == (N, NUM_TYPES)
    assert jnp.allclose(cls, rcls, rtol=1e-4, atol=1e-4)
    assert jnp.allclose(brand, rbrand, rtol=1e-4, atol=1e-4)
    assert jnp.allclose(typ, rtyp, rtol=1e-4, atol=1e-4)

    print("KERNEL_OK")
</pallas_src>

<mosaic_0001>
module attributes {stable_mosaic.version = 11 : i64} {
  func.func @fused_kernel(%arg0: memref<36x512xf32, #tpu.memory_space<vmem>>, %arg1: memref<144x128xf32, #tpu.memory_space<vmem>>, %arg2: memref<32x2xf32, #tpu.memory_space<vmem>>) attributes {dimension_semantics = [], scalar_prefetch = 0 : i64, scratch_operands = 0 : i64, tpu.core_type = #tpu.core_type<tc>} {
    %c0 = arith.constant 0 : index
    %c0_0 = arith.constant 0 : index
    %0 = vector.load %arg1[%c0, %c0_0] : memref<144x128xf32, #tpu.memory_space<vmem>>, vector<8x36xf32>
    %c8 = arith.constant 8 : index
    %c0_1 = arith.constant 0 : index
    %1 = vector.load %arg1[%c8, %c0_1] : memref<144x128xf32, #tpu.memory_space<vmem>>, vector<8x1xf32>
    %c16 = arith.constant 16 : index
    %c0_2 = arith.constant 0 : index
    %2 = vector.load %arg1[%c16, %c0_2] : memref<144x128xf32, #tpu.memory_space<vmem>>, vector<32x8xf32>
    %c48 = arith.constant 48 : index
    %c0_3 = arith.constant 0 : index
    %3 = vector.load %arg1[%c48, %c0_3] : memref<144x128xf32, #tpu.memory_space<vmem>>, vector<32x1xf32>
    %c80 = arith.constant 80 : index
    %c0_4 = arith.constant 0 : index
    %4 = vector.load %arg1[%c80, %c0_4] : memref<144x128xf32, #tpu.memory_space<vmem>>, vector<16x32xf32>
    %c96 = arith.constant 96 : index
    %c0_5 = arith.constant 0 : index
    %5 = vector.load %arg1[%c96, %c0_5] : memref<144x128xf32, #tpu.memory_space<vmem>>, vector<16x1xf32>
    %c112 = arith.constant 112 : index
    %c0_6 = arith.constant 0 : index
    %6 = vector.load %arg1[%c112, %c0_6] : memref<144x128xf32, #tpu.memory_space<vmem>>, vector<16x48xf32>
    %c128 = arith.constant 128 : index
    %c0_7 = arith.constant 0 : index
    %7 = vector.load %arg1[%c128, %c0_7] : memref<144x128xf32, #tpu.memory_space<vmem>>, vector<16x1xf32>
    %c0_8 = arith.constant 0 : index
    %c0_9 = arith.constant 0 : index
    %8 = vector.load %arg0[%c0_8, %c0_9] : memref<36x512xf32, #tpu.memory_space<vmem>>, vector<36x512xf32>
    %cst = arith.constant dense<0.000000e+00> : vector<8x512xf32>
    %9 = tpu.matmul %0, %8, %cst {dimension_numbers = #tpu.dot_dimension_numbers<[1], [0], [0], [1], [0, 0, 1, 1], [], []>} : vector<8x36xf32>, vector<36x512xf32>, vector<8x512xf32> -> vector<8x512xf32>
    %10 = vector.broadcast %1 : vector<8x1xf32> to vector<8x512xf32>
    %11 = arith.addf %9, %10 : vector<8x512xf32>
    %cst_10 = arith.constant 0.000000e+00 : f32
    %12 = vector.broadcast %cst_10 : f32 to vector<8x512xf32>
    %13 = arith.maximumf %11, %12 : vector<8x512xf32>
    %14 = vector.extract_strided_slice %13 {offsets = [0, 0], sizes = [8, 256], strides = [1, 1]} : vector<8x512xf32> to vector<8x256xf32>
    %cst_11 = arith.constant dense<0.000000e+00> : vector<8xf32>
    %15 = vector.multi_reduction <add>, %14, %cst_11 [1] : vector<8x256xf32> to vector<8xf32>
    %16 = vector.shape_cast %15 : vector<8xf32> to vector<8x1xf32>
    %17 = vector.extract_strided_slice %13 {offsets = [0, 256], sizes = [8, 256], strides = [1, 1]} : vector<8x512xf32> to vector<8x256xf32>
    %cst_12 = arith.constant dense<0.000000e+00> : vector<8xf32>
    %18 = vector.multi_reduction <add>, %17, %cst_12 [1] : vector<8x256xf32> to vector<8xf32>
    %19 = vector.shape_cast %18 : vector<8xf32> to vector<8x1xf32>
    %20 = tpu.concatenate %16, %19 in 1 : vector<8x1xf32>, vector<8x1xf32> -> vector<8x2xf32>
    %cst_13 = arith.constant 3.906250e-03 : f32
    %21 = vector.broadcast %cst_13 : f32 to vector<8x2xf32>
    %22 = arith.mulf %20, %21 : vector<8x2xf32>
    %cst_14 = arith.constant dense<0.000000e+00> : vector<32x2xf32>
    %23 = tpu.matmul %2, %22, %cst_14 {dimension_numbers = #tpu.dot_dimension_numbers<[1], [0], [0], [1], [0, 0, 1, 1], [], []>} : vector<32x8xf32>, vector<8x2xf32>, vector<32x2xf32> -> vector<32x2xf32>
    %24 = vector.broadcast %3 : vector<32x1xf32> to vector<32x2xf32>
    %25 = arith.addf %23, %24 : vector<32x2xf32>
    %cst_15 = arith.constant 0.000000e+00 : f32
    %26 = vector.broadcast %cst_15 : f32 to vector<32x2xf32>
    %27 = arith.maximumf %25, %26 : vector<32x2xf32>
    %cst_16 = arith.constant dense<0.000000e+00> : vector<16x2xf32>
    %28 = tpu.matmul %4, %27, %cst_16 {dimension_numbers = #tpu.dot_dimension_numbers<[1], [0], [0], [1], [0, 0, 1, 1], [], []>} : vector<16x32xf32>, vector<32x2xf32>, vector<16x2xf32> -> vector<16x2xf32>
    %29 = vector.broadcast %5 : vector<16x1xf32> to vector<16x2xf32>
    %30 = arith.addf %28, %29 : vector<16x2xf32>
    %cst_17 = arith.constant 0.000000e+00 : f32
    %31 = vector.broadcast %cst_17 : f32 to vector<32x2xf32>
    %32 = arith.maximumf %27, %31 : vector<32x2xf32>
    %cst_18 = arith.constant 0.000000e+00 : f32
    %33 = vector.broadcast %cst_18 : f32 to vector<16x2xf32>
    %34 = arith.maximumf %30, %33 : vector<16x2xf32>
    %35 = tpu.concatenate %32, %34 in 0 : vector<32x2xf32>, vector<16x2xf32> -> vector<48x2xf32>
    %cst_19 = arith.constant dense<0.000000e+00> : vector<16x2xf32>
    %36 = tpu.matmul %6, %35, %cst_19 {dimension_numbers = #tpu.dot_dimension_numbers<[1], [0], [0], [1], [0, 0, 1, 1], [], []>} : vector<16x48xf32>, vector<48x2xf32>, vector<16x2xf32> -> vector<16x2xf32>
    %37 = vector.broadcast %7 : vector<16x1xf32> to vector<16x2xf32>
    %38 = arith.addf %36, %37 : vector<16x2xf32>
    %39 = tpu.concatenate %38, %30 in 0 : vector<16x2xf32>, vector<16x2xf32> -> vector<32x2xf32>
    %c0_20 = arith.constant 0 : index
    %c0_21 = arith.constant 0 : index
    %40 = vector.load %arg2[%c0_20, %c0_21] : memref<32x2xf32, #tpu.memory_space<vmem>>, vector<32x2xf32>
    tpu.vector_store %arg2[%c0_20, %c0_21], %39 {strides = array<i32>} : memref<32x2xf32, #tpu.memory_space<vmem>>, vector<32x2xf32>,
    return
  }
}

</mosaic_0001>

<llo_original>
// kernel: mtlc_stanford_forward.1
$region0: #{mtlc_stanford_forward.1}
  #allocation0 [shape = 'u32[]', space=smem, size = 0x4, offset = 0x4, fixed_abs, tag = 'smem constant byte address 0x4 - core index']
  #allocation1 [shape = 'u32[144,128]{1,0:T(1,128)}', space=vmem, size = 0x12000, scoped, tag = 'internal scratch']
  %s0 = inlined_call_operand.vmem [shape: f32[36,512], index: 0, kind: input, shape index: {}]
  %s1 = inlined_call_operand.vmem [shape: f32[144,128], index: 1, kind: input, shape index: {}]
  %s2 = inlined_call_operand.vmem [shape: f32[32,2], index: 2, kind: output, shape index: {}]
  %s3 = sld [smem:[#allocation0]]
  $region18: #{mtlc_stanford_forward.1} parent=0
    _
  %s5 = ssub.s32 1, %s3
  %s6 = scalar_select 0, %s5, %s3
  // Predicated region
  $region2: #{mtlc_stanford_forward.1} parent=0 // pred_check
    _
  $region3: #{mtlc_stanford_forward.1} parent=0 // pred_check_branch
    %8 = sbr.rel (0) target = $region5
  $region4: #{mtlc_stanford_forward.1} parent=0 // pred_region
    _
  $region5: #{mtlc_stanford_forward.1} parent=0 // pred_fallthru
    _
  // Predicated region
  $region6: #{mtlc_stanford_forward.1} parent=0 // pred_check
    _
  $region7: #{mtlc_stanford_forward.1} parent=0 // pred_check_branch
    %10 = sbr.rel (0) target = $region9
  $region8: #{mtlc_stanford_forward.1} parent=0 // pred_region
    _
  $region9: #{mtlc_stanford_forward.1} parent=0 // pred_fallthru
    _
  %v11 = vld [vmem:[%s1] sm:$0xff]
  %v12 = vld [vmem:[%s1 + $0x8] sm:$0xff]
  %v13 = vld [vmem:[%s1 + $0x10] sm:$0xff]
  %v14 = vld [vmem:[%s1 + $0x18] sm:$0xff]
  %v15 = vld [vmem:[%s1 + $0x20] sm:$0xff]
  %v16 = vld [vmem:[%s1 + $0x28] sm:$0xff]
  %v17 = vld [vmem:[%s1 + $0x30] sm:$0xff]
  %v18 = vld [vmem:[%s1 + $0x38] sm:$0xff]
  %v19 = vld [vmem:[%s1 + $0x40] sm:$0xff]
  %v20 = vld [vmem:[%s1 + $0x48] sm:$0xff]
  %v21 = vld [vmem:[%s1 + $0x50] sm:$0xff]
  %v22 = vld [vmem:[%s1 + $0x58] sm:$0xff]
  %v23 = vld [vmem:[%s1 + $0x60] sm:$0xff]
  %v24 = vld [vmem:[%s1 + $0x68] sm:$0xff]
  %v25 = vld [vmem:[%s1 + $0x70] sm:$0xff]
  %v26 = vld [vmem:[%s1 + $0x78] sm:$0xff]
  %v27 = vld [vmem:[%s1 + $0x80] sm:$0xff]
  %v28 = vld [vmem:[%s1 + $0x88] sm:$0xff]
  %v29 = vld [vmem:[%s0] sm:$0xff]
  %v30 = vld [vmem:[%s0 + $0x8] sm:$0xff]
  %v31 = vld [vmem:[%s0 + $0x10] sm:$0xff]
  %v32 = vld [vmem:[%s0 + $0x18] sm:$0xff]
  %v33 = vld [vmem:[%s0 + $0x20] sm:$0xff]
  %v34 = vld [vmem:[%s0 + $0x28] sm:$0xff]
  %v35 = vld [vmem:[%s0 + $0x30] sm:$0xff]
  %v36 = vld [vmem:[%s0 + $0x38] sm:$0xff]
  %v37 = vld [vmem:[%s0 + $0x40] sm:$0xff]
  %v38 = vld [vmem:[%s0 + $0x48] sm:$0xff]
  %v39 = vld [vmem:[%s0 + $0x50] sm:$0xff]
  %v40 = vld [vmem:[%s0 + $0x58] sm:$0xff]
  %v41 = vld [vmem:[%s0 + $0x60] sm:$0xff]
  %v42 = vld [vmem:[%s0 + $0x68] sm:$0xff]
  %v43 = vld [vmem:[%s0 + $0x70] sm:$0xff]
  %v44 = vld [vmem:[%s0 + $0x78] sm:$0xff]
  %v45 = vld [vmem:[%s0 + $0x80] sm:$0xf]
  %v46 = vld [vmem:[%s0 + $0x88] sm:$0xf]
  %v47 = vld [vmem:[%s0 + $0x90] sm:$0xf]
  %v48 = vld [vmem:[%s0 + $0x98] sm:$0xf]
  %50 = vset.pattern.permute.xlu0 0
  %51 = vperm.xlu0 %50, %v12
  %v52 = vpop.permute.xlu0 %51
  %vm54 = vcmask 293888
  %v56 = vsel %vm54, %v11, 0
  %vm58 = vcmask 1043456
  %v60 = vsel %vm58, %v45, 0
  %v63 = vsel %vm58, %v46, 0
  %v66 = vsel %vm58, %v47, 0
  %v69 = vsel %vm58, %v48, 0
  %71 = vmatprep.subr.mxu0 0.0
  %72 = vmatpush1.msra.mxu0 0.0
  %73 = vmatprep.subr.mxu0 0.0
  %74 = vmatpush1.msra.mxu0 0.0
  %75 = vmatprep.subr.mxu0 0.0
  %76 = vmatpush1.msra.mxu0 0.0
  %77 = vmatprep.subr.mxu0 0.0
  %78 = vmatpush1.msra.mxu0 0.0
  %79 = vmatprep.subr.mxu0 0.0
  %80 = vmatpush1.msra.mxu0 0.0
  %81 = vmatprep.subr.mxu0 0.0
  %82 = vmatpush1.msra.mxu0 0.0
  %83 = vmatprep.subr.mxu0 0.0
  %84 = vmatpush1.msra.mxu0 0.0
  %85 = vmatprep.subr.mxu0 0.0
  %86 = vmatpush1.msra.mxu0 0.0
  %87 = vmatprep.subr.mxu0 0.0
  %88 = vmatpush1.msra.mxu0 0.0
  %89 = vmatprep.subr.mxu0 0.0
  %90 = vmatpush1.msra.mxu0 0.0
  %91 = vmatprep.subr.mxu0 0.0
  %92 = vmatpush1.msra.mxu0 0.0
  %93 = vmatprep.subr.mxu0 %v63
  %94 = vmatpush1.msra.mxu0 %v60
  %95 = vmatprep.subr.mxu0 %v42
  %96 = vmatpush1.msra.mxu0 %v41
  %97 = vmatprep.subr.mxu0 %v38
  %98 = vmatpush1.msra.mxu0 %v37
  %99 = vmatprep.subr.mxu0 %v34
  %100 = vmatpush1.msra.mxu0 %v33
  %101 = vmatprep.subr.mxu0 %v30
  %102 = vmatpush1.msra.mxu0 %v29
  %103 = vmatprep.subr.mxu0 0.0
  %104 = vmatpush2.msra.mxu0 0.0
  %105 = vmatprep.subr.mxu0 0.0
  %106 = vmatpush2.msra.mxu0 0.0
  %107 = vmatprep.subr.mxu0 0.0
  %108 = vmatpush2.msra.mxu0 0.0
  %109 = vmatprep.subr.mxu0 0.0
  %110 = vmatpush2.msra.mxu0 0.0
  %111 = vmatprep.subr.mxu0 0.0
  %112 = vmatpush2.msra.mxu0 0.0
  %113 = vmatprep.subr.mxu0 0.0
  %114 = vmatpush2.msra.mxu0 0.0
  %115 = vmatprep.subr.mxu0 0.0
  %116 = vmatpush2.msra.mxu0 0.0
  %117 = vmatprep.subr.mxu0 0.0
  %118 = vmatpush2.msra.mxu0 0.0
  %119 = vmatprep.subr.mxu0 0.0
  %120 = vmatpush2.msra.mxu0 0.0
  %121 = vmatprep.subr.mxu0 0.0
  %122 = vmatpush2.msra.mxu0 0.0
  %123 = vmatprep.subr.mxu0 0.0
  %124 = vmatpush2.msra.mxu0 0.0
  %125 = vmatprep.subr.mxu0 0.0
  %126 = vmatpush2.msra.mxu0 0.0
  %127 = vmatprep.subr.mxu0 0.0
  %128 = vmatpush2.msra.mxu0 0.0
  %129 = vmatprep.subr.mxu0 0.0
  %130 = vmatpush2.msra.mxu0 0.0
  %131 = vmatprep.subr.mxu0 0.0
  %132 = vmatpush2.msra.mxu0 0.0
  %133 = vmatprep.subr.mxu0 0.0
  %134 = vmatpush2.msra.mxu0 0.0
  %135 = vmatprep.mubr.f32.mxu0 0.0
  %136 = vmatmul.mubr.f32.gmra.mxu0 %v56
  %v137 = vpop.f32.mrf.mxu0
  %v138 = vadd.f32 %v52, %v137
  %v139 = vpop.f32.mrf.mxu0
  %v140 = vadd.f32 %v52, %v139
  %141 = vdwg.mxu0
  %142 = vmatprep.subr.mxu0 0.0
  %143 = vmatpush1.msra.mxu0 0.0
  %144 = vmatprep.subr.mxu0 0.0
  %145 = vmatpush1.msra.mxu0 0.0
  %146 = vmatprep.subr.mxu0 0.0
  %147 = vmatpush1.msra.mxu0 0.0
  %148 = vmatprep.subr.mxu0 0.0
  %149 = vmatpush1.msra.mxu0 0.0
  %150 = vmatprep.subr.mxu0 0.0
  %151 = vmatpush1.msra.mxu0 0.0
  %152 = vmatprep.subr.mxu0 0.0
  %153 = vmatpush1.msra.mxu0 0.0
  %154 = vmatprep.subr.mxu0 0.0
  %155 = vmatpush1.msra.mxu0 0.0
  %156 = vmatprep.subr.mxu0 0.0
  %157 = vmatpush1.msra.mxu0 0.0
  %158 = vmatprep.subr.mxu0 0.0
  %159 = vmatpush1.msra.mxu0 0.0
  %160 = vmatprep.subr.mxu0 0.0
  %161 = vmatpush1.msra.mxu0 0.0
  %162 = vmatprep.subr.mxu0 0.0
  %163 = vmatpush1.msra.mxu0 0.0
  %164 = vmatprep.subr.mxu0 %v69
  %165 = vmatpush1.msra.mxu0 %v66
  %166 = vmatprep.subr.mxu0 %v44
  %167 = vmatpush1.msra.mxu0 %v43
  %168 = vmatprep.subr.mxu0 %v40
  %169 = vmatpush1.msra.mxu0 %v39
  %170 = vmatprep.subr.mxu0 %v36
  %171 = vmatpush1.msra.mxu0 %v35
  %172 = vmatprep.subr.mxu0 %v32
  %173 = vmatpush1.msra.mxu0 %v31
  %174 = vmatprep.subr.mxu0 0.0
  %175 = vmatpush2.msra.mxu0 0.0
  %176 = vmatprep.subr.mxu0 0.0
  %177 = vmatpush2.msra.mxu0 0.0
  %178 = vmatprep.subr.mxu0 0.0
  %179 = vmatpush2.msra.mxu0 0.0
  %180 = vmatprep.subr.mxu0 0.0
  %181 = vmatpush2.msra.mxu0 0.0
  %182 = vmatprep.subr.mxu0 0.0
  %183 = vmatpush2.msra.mxu0 0.0
  %184 = vmatprep.subr.mxu0 0.0
  %185 = vmatpush2.msra.mxu0 0.0
  %186 = vmatprep.subr.mxu0 0.0
  %187 = vmatpush2.msra.mxu0 0.0
  %188 = vmatprep.subr.mxu0 0.0
  %189 = vmatpush2.msra.mxu0 0.0
  %190 = vmatprep.subr.mxu0 0.0
  %191 = vmatpush2.msra.mxu0 0.0
  %192 = vmatprep.subr.mxu0 0.0
  %193 = vmatpush2.msra.mxu0 0.0
  %194 = vmatprep.subr.mxu0 0.0
  %195 = vmatpush2.msra.mxu0 0.0
  %196 = vmatprep.subr.mxu0 0.0
  %197 = vmatpush2.msra.mxu0 0.0
  %198 = vmatprep.subr.mxu0 0.0
  %199 = vmatpush2.msra.mxu0 0.0
  %200 = vmatprep.subr.mxu0 0.0
  %201 = vmatpush2.msra.mxu0 0.0
  %202 = vmatprep.subr.mxu0 0.0
  %203 = vmatpush2.msra.mxu0 0.0
  %204 = vmatprep.subr.mxu0 0.0
  %205 = vmatpush2.msra.mxu0 0.0
  %206 = vmatprep.mubr.f32.mxu0 0.0
  %207 = vmatmul.mubr.f32.gmra.mxu0 %v56
  %v208 = vpop.f32.mrf.mxu0
  %v209 = vadd.f32 %v52, %v208
  %v210 = vpop.f32.mrf.mxu0
  %v211 = vadd.f32 %v52, %v210
  %212 = vdwg.mxu0
  %v213 = vmax.f32 %v138, 0.0
  %v214 = vmax.f32 %v140, 0.0
  %v215 = vmax.f32 %v209, 0.0
  %v216 = vmax.f32 %v211, 0.0
  %v217 = vadd.f32 %v213, %v214
  %218 = vadd.xlane.f32.xlu0 %v217
  %v219 = vpop.xlane.xlu0 %218
  %v220 = vadd.f32 %v215, %v216
  %221 = vadd.xlane.f32.xlu0 %v220
  %v222 = vpop.xlane.xlu0 %221
  %vm223 = vcmask 7168
  %v224 = vsel %vm223, %v219, %v222
  %v225 = vmul.f32 %v224, 0.00390625
  %227 = vset.pattern.permute.xlu0 0
  %228 = vperm.xlu0 %227, %v17
  %v229 = vpop.permute.xlu0 %228
  %232 = vset.pattern.permute.xlu0 0
  %233 = vperm.xlu0 %232, %v18
  %v234 = vpop.permute.xlu0 %233
  %237 = vset.pattern.permute.xlu0 0
  %238 = vperm.xlu0 %237, %v19
  %v239 = vpop.permute.xlu0 %238
  %242 = vset.pattern.permute.xlu0 0
  %243 = vperm.xlu0 %242, %v20
  %v244 = vpop.permute.xlu0 %243
  %vm246 = vcmask 64512
  %v248 = vsel %vm246, %v13, 0
  %v251 = vsel %vm246, %v14, 0
  %v254 = vsel %vm246, %v15, 0
  %v257 = vsel %vm246, %v16, 0
  %259 = vmatprep.subr.mxu0 0.0
  %260 = vmatpush1.msra.mxu0 0.0
  %261 = vmatprep.subr.mxu0 0.0
  %262 = vmatpush1.msra.mxu0 0.0
  %263 = vmatprep.subr.mxu0 0.0
  %264 = vmatpush1.msra.mxu0 0.0
  %265 = vmatprep.subr.mxu0 0.0
  %266 = vmatpush1.msra.mxu0 0.0
  %267 = vmatprep.subr.mxu0 0.0
  %268 = vmatpush1.msra.mxu0 0.0
  %269 = vmatprep.subr.mxu0 0.0
  %270 = vmatpush1.msra.mxu0 0.0
  %271 = vmatprep.subr.mxu0 0.0
  %272 = vmatpush1.msra.mxu0 0.0
  %273 = vmatprep.subr.mxu0 0.0
  %274 = vmatpush1.msra.mxu0 0.0
  %275 = vmatprep.subr.mxu0 0.0
  %276 = vmatpush1.msra.mxu0 0.0
  %277 = vmatprep.subr.mxu0 0.0
  %278 = vmatpush1.msra.mxu0 0.0
  %279 = vmatprep.subr.mxu0 0.0
  %280 = vmatpush1.msra.mxu0 0.0
  %281 = vmatprep.subr.mxu0 0.0
  %282 = vmatpush1.msra.mxu0 0.0
  %283 = vmatprep.subr.mxu0 0.0
  %284 = vmatpush1.msra.mxu0 0.0
  %285 = vmatprep.subr.mxu0 0.0
  %286 = vmatpush1.msra.mxu0 0.0
  %287 = vmatprep.subr.mxu0 0.0
  %288 = vmatpush1.msra.mxu0 0.0
  %289 = vmatprep.subr.mxu0 0.0
  %290 = vmatpush1.msra.mxu0 %v225
  %291 = vmatprep.subr.mxu0 0.0
  %292 = vmatpush2.msra.mxu0 0.0
  %293 = vmatprep.subr.mxu0 0.0
  %294 = vmatpush2.msra.mxu0 0.0
  %295 = vmatprep.subr.mxu0 0.0
  %296 = vmatpush2.msra.mxu0 0.0
  %297 = vmatprep.subr.mxu0 0.0
  %298 = vmatpush2.msra.mxu0 0.0
  %299 = vmatprep.subr.mxu0 0.0
  %300 = vmatpush2.msra.mxu0 0.0
  %301 = vmatprep.subr.mxu0 0.0
  %302 = vmatpush2.msra.mxu0 0.0
  %303 = vmatprep.subr.mxu0 0.0
  %304 = vmatpush2.msra.mxu0 0.0
  %305 = vmatprep.subr.mxu0 0.0
  %306 = vmatpush2.msra.mxu0 0.0
  %307 = vmatprep.subr.mxu0 0.0
  %308 = vmatpush2.msra.mxu0 0.0
  %309 = vmatprep.subr.mxu0 0.0
  %310 = vmatpush2.msra.mxu0 0.0
  %311 = vmatprep.subr.mxu0 0.0
  %312 = vmatpush2.msra.mxu0 0.0
  %313 = vmatprep.subr.mxu0 0.0
  %314 = vmatpush2.msra.mxu0 0.0
  %315 = vmatprep.subr.mxu0 0.0
  %316 = vmatpush2.msra.mxu0 0.0
  %317 = vmatprep.subr.mxu0 0.0
  %318 = vmatpush2.msra.mxu0 0.0
  %319 = vmatprep.subr.mxu0 0.0
  %320 = vmatpush2.msra.mxu0 0.0
  %321 = vmatprep.subr.mxu0 0.0
  %322 = vmatpush2.msra.mxu0 0.0
  %323 = vmatprep.mubr.f32.mxu0 0.0
  %324 = vmatmul.mubr.f32.gmra.mxu0 %v248
  %v325 = vpop.f32.mrf.mxu0
  %v326 = vadd.f32 %v229, %v325
  %v327 = vpop.f32.mrf.mxu0
  %328 = vmatprep.mubr.f32.mxu0 0.0
  %329 = vmatmul.mubr.f32.gmra.mxu0 %v251
  %v330 = vpop.f32.mrf.mxu0
  %v331 = vadd.f32 %v234, %v330
  %v332 = vpop.f32.mrf.mxu0
  %333 = vmatprep.mubr.f32.mxu0 0.0
  %334 = vmatmul.mubr.f32.gmra.mxu0 %v254
  %v335 = vpop.f32.mrf.mxu0
  %v336 = vadd.f32 %v239, %v335
  %v337 = vpop.f32.mrf.mxu0
  %338 = vmatprep.mubr.f32.mxu0 0.0
  %339 = vmatmul.mubr.f32.gmra.mxu0 %v257
  %v340 = vpop.f32.mrf.mxu0
  %v341 = vadd.f32 %v244, %v340
  %v342 = vpop.f32.mrf.mxu0
  %343 = vdwg.mxu0
  %v344 = vmax.f32 %v326, 0.0
  %v345 = vmax.f32 %v331, 0.0
  %v346 = vmax.f32 %v336, 0.0
  %v347 = vmax.f32 %v341, 0.0
  %349 = vset.pattern.permute.xlu0 0
  %350 = vperm.xlu0 %349, %v23
  %v351 = vpop.permute.xlu0 %350
  %354 = vset.pattern.permute.xlu0 0
  %355 = vperm.xlu0 %354, %v24
  %v356 = vpop.permute.xlu0 %355
  %vm358 = vcmask 261120
  %v360 = vsel %vm358, %v21, 0
  %v363 = vsel %vm358, %v22, 0
  %365 = vmatprep.subr.mxu0 0.0
  %366 = vmatpush1.msra.mxu0 0.0
  %367 = vmatprep.subr.mxu0 0.0
  %368 = vmatpush1.msra.mxu0 0.0
  %369 = vmatprep.subr.mxu0 0.0
  %370 = vmatpush1.msra.mxu0 0.0
  %371 = vmatprep.subr.mxu0 0.0
  %372 = vmatpush1.msra.mxu0 0.0
  %373 = vmatprep.subr.mxu0 0.0
  %374 = vmatpush1.msra.mxu0 0.0
  %375 = vmatprep.subr.mxu0 0.0
  %376 = vmatpush1.msra.mxu0 0.0
  %377 = vmatprep.subr.mxu0 0.0
  %378 = vmatpush1.msra.mxu0 0.0
  %379 = vmatprep.subr.mxu0 0.0
  %380 = vmatpush1.msra.mxu0 0.0
  %381 = vmatprep.subr.mxu0 0.0
  %382 = vmatpush1.msra.mxu0 0.0
  %383 = vmatprep.subr.mxu0 0.0
  %384 = vmatpush1.msra.mxu0 0.0
  %385 = vmatprep.subr.mxu0 0.0
  %386 = vmatpush1.msra.mxu0 0.0
  %387 = vmatprep.subr.mxu0 0.0
  %388 = vmatpush1.msra.mxu0 0.0
  %389 = vmatprep.subr.mxu0 0.0
  %390 = vmatpush1.msra.mxu0 %v347
  %391 = vmatprep.subr.mxu0 0.0
  %392 = vmatpush1.msra.mxu0 %v346
  %393 = vmatprep.subr.mxu0 0.0
  %394 = vmatpush1.msra.mxu0 %v345
  %395 = vmatprep.subr.mxu0 0.0
  %396 = vmatpush1.msra.mxu0 %v344
  %397 = vmatprep.subr.mxu0 0.0
  %398 = vmatpush2.msra.mxu0 0.0
  %399 = vmatprep.subr.mxu0 0.0
  %400 = vmatpush2.msra.mxu0 0.0
  %401 = vmatprep.subr.mxu0 0.0
  %402 = vmatpush2.msra.mxu0 0.0
  %403 = vmatprep.subr.mxu0 0.0
  %404 = vmatpush2.msra.mxu0 0.0
  %405 = vmatprep.subr.mxu0 0.0
  %406 = vmatpush2.msra.mxu0 0.0
  %407 = vmatprep.subr.mxu0 0.0
  %408 = vmatpush2.msra.mxu0 0.0
  %409 = vmatprep.subr.mxu0 0.0
  %410 = vmatpush2.msra.mxu0 0.0
  %411 = vmatprep.subr.mxu0 0.0
  %412 = vmatpush2.msra.mxu0 0.0
  %413 = vmatprep.subr.mxu0 0.0
  %414 = vmatpush2.msra.mxu0 0.0
  %415 = vmatprep.subr.mxu0 0.0
  %416 = vmatpush2.msra.mxu0 0.0
  %417 = vmatprep.subr.mxu0 0.0
  %418 = vmatpush2.msra.mxu0 0.0
  %419 = vmatprep.subr.mxu0 0.0
  %420 = vmatpush2.msra.mxu0 0.0
  %421 = vmatprep.subr.mxu0 0.0
  %422 = vmatpush2.msra.mxu0 0.0
  %423 = vmatprep.subr.mxu0 0.0
  %424 = vmatpush2.msra.mxu0 0.0
  %425 = vmatprep.subr.mxu0 0.0
  %426 = vmatpush2.msra.mxu0 0.0
  %427 = vmatprep.subr.mxu0 0.0
  %428 = vmatpush2.msra.mxu0 0.0
  %429 = vmatprep.mubr.f32.mxu0 0.0
  %430 = vmatmul.mubr.f32.gmra.mxu0 %v360
  %v431 = vpop.f32.mrf.mxu0
  %v432 = vadd.f32 %v351, %v431
  %v433 = vpop.f32.mrf.mxu0
  %434 = vmatprep.mubr.f32.mxu0 0.0
  %435 = vmatmul.mubr.f32.gmra.mxu0 %v363
  %v436 = vpop.f32.mrf.mxu0
  %v437 = vadd.f32 %v356, %v436
  %v438 = vpop.f32.mrf.mxu0
  %439 = vdwg.mxu0
  %v440 = vmax.f32 %v344, 0.0
  %v441 = vmax.f32 %v345, 0.0
  %v442 = vmax.f32 %v346, 0.0
  %v443 = vmax.f32 %v347, 0.0
  %v444 = vmax.f32 %v432, 0.0
  %v445 = vmax.f32 %v437, 0.0
  %447 = vset.pattern.permute.xlu0 0
  %448 = vperm.xlu0 %447, %v27
  %v449 = vpop.permute.xlu0 %448
  %452 = vset.pattern.permute.xlu0 0
  %453 = vperm.xlu0 %452, %v28
  %v454 = vpop.permute.xlu0 %453
  %vm456 = vcmask 392192
  %v458 = vsel %vm456, %v25, 0
  %v461 = vsel %vm456, %v26, 0
  %463 = vmatprep.subr.mxu0 0.0
  %464 = vmatpush1.msra.mxu0 0.0
  %465 = vmatprep.subr.mxu0 0.0
  %466 = vmatpush1.msra.mxu0 0.0
  %467 = vmatprep.subr.mxu0 0.0
  %468 = vmatpush1.msra.mxu0 0.0
  %469 = vmatprep.subr.mxu0 0.0
  %470 = vmatpush1.msra.mxu0 0.0
  %471 = vmatprep.subr.mxu0 0.0
  %472 = vmatpush1.msra.mxu0 0.0
  %473 = vmatprep.subr.mxu0 0.0
  %474 = vmatpush1.msra.mxu0 0.0
  %475 = vmatprep.subr.mxu0 0.0
  %476 = vmatpush1.msra.mxu0 0.0
  %477 = vmatprep.subr.mxu0 0.0
  %478 = vmatpush1.msra.mxu0 0.0
  %479 = vmatprep.subr.mxu0 0.0
  %480 = vmatpush1.msra.mxu0 0.0
  %481 = vmatprep.subr.mxu0 0.0
  %482 = vmatpush1.msra.mxu0 0.0
  %483 = vmatprep.subr.mxu0 0.0
  %484 = vmatpush1.msra.mxu0 %v445
  %485 = vmatprep.subr.mxu0 0.0
  %486 = vmatpush1.msra.mxu0 %v444
  %487 = vmatprep.subr.mxu0 0.0
  %488 = vmatpush1.msra.mxu0 %v443
  %489 = vmatprep.subr.mxu0 0.0
  %490 = vmatpush1.msra.mxu0 %v442
  %491 = vmatprep.subr.mxu0 0.0
  %492 = vmatpush1.msra.mxu0 %v441
  %493 = vmatprep.subr.mxu0 0.0
  %494 = vmatpush1.msra.mxu0 %v440
  %495 = vmatprep.subr.mxu0 0.0
  %496 = vmatpush2.msra.mxu0 0.0
  %497 = vmatprep.subr.mxu0 0.0
  %498 = vmatpush2.msra.mxu0 0.0
  %499 = vmatprep.subr.mxu0 0.0
  %500 = vmatpush2.msra.mxu0 0.0
  %501 = vmatprep.subr.mxu0 0.0
  %502 = vmatpush2.msra.mxu0 0.0
  %503 = vmatprep.subr.mxu0 0.0
  %504 = vmatpush2.msra.mxu0 0.0
  %505 = vmatprep.subr.mxu0 0.0
  %506 = vmatpush2.msra.mxu0 0.0
  %507 = vmatprep.subr.mxu0 0.0
  %508 = vmatpush2.msra.mxu0 0.0
  %509 = vmatprep.subr.mxu0 0.0
  %510 = vmatpush2.msra.mxu0 0.0
  %511 = vmatprep.subr.mxu0 0.0
  %512 = vmatpush2.msra.mxu0 0.0
  %513 = vmatprep.subr.mxu0 0.0
  %514 = vmatpush2.msra.mxu0 0.0
  %515 = vmatprep.subr.mxu0 0.0
  %516 = vmatpush2.msra.mxu0 0.0
  %517 = vmatprep.subr.mxu0 0.0
  %518 = vmatpush2.msra.mxu0 0.0
  %519 = vmatprep.subr.mxu0 0.0
  %520 = vmatpush2.msra.mxu0 0.0
  %521 = vmatprep.subr.mxu0 0.0
  %522 = vmatpush2.msra.mxu0 0.0
  %523 = vmatprep.subr.mxu0 0.0
  %524 = vmatpush2.msra.mxu0 0.0
  %525 = vmatprep.subr.mxu0 0.0
  %526 = vmatpush2.msra.mxu0 0.0
  %527 = vmatprep.mubr.f32.mxu0 0.0
  %528 = vmatmul.mubr.f32.gmra.mxu0 %v458
  %v529 = vpop.f32.mrf.mxu0
  %v530 = vadd.f32 %v449, %v529
  %v531 = vpop.f32.mrf.mxu0
  %532 = vmatprep.mubr.f32.mxu0 0.0
  %533 = vmatmul.mubr.f32.gmra.mxu0 %v461
  %v534 = vpop.f32.mrf.mxu0
  %v535 = vadd.f32 %v454, %v534
  %v536 = vpop.f32.mrf.mxu0
  %537 = vdwg.mxu0
  %vm538 = vcmask 15360
  %539 = vst.msk [vmem:[%s2] sm:$0xff] %vm538, %v530
  %540 = vst.msk [vmem:[%s2 + $0x8] sm:$0xff] %vm538, %v535
  %541 = vst.msk [vmem:[%s2 + $0x10] sm:$0xff] %vm538, %v432
  %542 = vst.msk [vmem:[%s2 + $0x18] sm:$0xff] %vm538, %v437
  // Predicated region
  $region10: #{mtlc_stanford_forward.1} parent=0 // pred_check
    _
  $region11: #{mtlc_stanford_forward.1} parent=0 // pred_check_branch
    %544 = sbr.rel (0) target = $region13
  $region12: #{mtlc_stanford_forward.1} parent=0 // pred_region
    _
  $region13: #{mtlc_stanford_forward.1} parent=0 // pred_fallthru
    _
  // Predicated region
  $region14: #{mtlc_stanford_forward.1} parent=0 // pred_check
    _
  $region15: #{mtlc_stanford_forward.1} parent=0 // pred_check_branch
    %546 = sbr.rel (0) target = $region17
  $region16: #{mtlc_stanford_forward.1} parent=0 // pred_region
    _
  $region17: #{mtlc_stanford_forward.1} parent=0 // pred_fallthru
    _

</llo_original>
